<compile_context>
chip_gen: v5e
topology: v5e:2x2
jax: 0.10.0
libtpu: 0.0.40
codegen_flags: <defaults>
</compile_context>

<pallas_src>
import jax
import jax.numpy as jnp
from jax.experimental import pallas as pl
from jax.experimental.pallas import tpu as pltpu

# Module hyper-parameters:
# SparseConvTranspose(in_channels, out_channels, kernel_size, stride, dimension)
IN_CHANNELS = 4
OUT_CHANNELS = 8
KERNEL_SIZE = 2
STRIDE = 2
DIMENSION = 2   # 2-D sparse transposed conv


def _feature_matmul_kernel(a_ref, b_ref, o_ref):
    # a_ref: (tm, Cin)        block of flattened input features
    # b_ref: (Cin, Npad)      full (lane-padded) weight slab, grid-invariant
    # o_ref: (tm, Npad)       lane-dense per-offset output contributions
    o_ref[...] = jnp.dot(a_ref[...], b_ref[...], preferred_element_type=jnp.float32)


def pallas_feature_matmul(a, b, *, target_steps=2):
    """(M, Cin) @ (Cin, Npad) on the MXU.

    Npad must be a multiple of 128 (lane-dense stores). M is tiled into ~target_steps
    grid steps (>=2 keeps both v7x TensorCores fed via the "parallel" axis); M is
    zero-padded to a multiple of the tile if needed.
    """
    M, Cin = a.shape
    Cin2, Npad = b.shape
    assert Cin == Cin2
    assert Npad % 128 == 0, "pad weight lane dim to a multiple of 128 before calling"

    # Largest sublane-aligned tile giving ~target_steps steps. At realistic channel
    # counts, also check 2 * tm * (Cin + Npad) * 4B against the scoped VMEM limit
    # (32 MiB default; v7x physical VMEM is only 64 MiB per TC).
    tm = max(8, pl.cdiv(pl.cdiv(M, target_steps), 8) * 8)
    Mp = pl.cdiv(M, tm) * tm
    if Mp != M:
        a = jnp.pad(a, ((0, Mp - M), (0, 0)))

    out = pl.pallas_call(
        _feature_matmul_kernel,
        out_shape=jax.ShapeDtypeStruct((Mp, Npad), jnp.float32),
        grid=(Mp // tm,),
        in_specs=[
            pl.BlockSpec((tm, Cin), lambda i: (i, 0)),
            # Constant (0, 0) index map: weight slab is grid-invariant; at these sizes
            # it is a ~2 KiB tile so re-DMA/double-buffering cost is negligible.
            pl.BlockSpec((Cin, Npad), lambda i: (0, 0)),
        ],
        out_specs=pl.BlockSpec((tm, Npad), lambda i: (i, 0)),
        compiler_params=pltpu.CompilerParams(
            dimension_semantics=("parallel",)),
    )(a, b)
    return out[:M] if Mp != M else out


def sparse_conv_transpose_forward_nhwc(x_nhwc, weight_kv_ci_co, kernel_size, stride):
    """Channels-last core: dense-grid MinkowskiConvolutionTranspose forward.

    x_nhwc:          (N, H, W, Cin) float32
    weight_kv_ci_co: (K*K, Cin, Cout)  -- MinkowskiEngine kernel layout
    returns:         (N, Ho, Wo, Cout) with Ho = (H-1)*S + K (no padding, no bias)
    """
    N, H, W, Cin = x_nhwc.shape
    KV, Cin_w, Cout = weight_kv_ci_co.shape
    K, S = kernel_size, stride
    assert KV == K * K and Cin_w == Cin

    # Flatten activations to rows; build (Cin, KV*Cout) weight slab, lane-padded to 128.
    # (At real channel counts, casting a/b to bf16 here halves HBM traffic and matches
    #  the v6e/v7x MXU native path; kept f32 for bit-fidelity at this demo size.)
    a = x_nhwc.reshape(N * H * W, Cin).astype(jnp.float32)
    b = jnp.transpose(weight_kv_ci_co, (1, 0, 2)).reshape(Cin, KV * Cout)
    b = b.astype(jnp.float32)
    n_cols = KV * Cout
    n_pad = pl.cdiv(n_cols, 128) * 128
    if n_pad != n_cols:
        b = jnp.pad(b, ((0, 0), (0, n_pad - n_cols)))   # extra MXU columns are free

    contrib = pallas_feature_matmul(a, b)               # (M, n_pad), lane-dense stores
    contrib = contrib[:, :n_cols].reshape(N, H, W, K, K, Cout)

    Ho = (H - 1) * S + K
    Wo = (W - 1) * S + K
    if S == K:
        # Non-overlapping taps: ConvTranspose is exactly a pixel-shuffle.
        y = jnp.transpose(contrib, (0, 1, 3, 2, 4, 5)).reshape(N, Ho, Wo, Cout)
    else:
        # General (possibly overlapping) case: strided scatter-add fallback.
        y = jnp.zeros((N, Ho, Wo, Cout), jnp.float32)
        for kh in range(K):
            for kw in range(K):
                y = y.at[:, kh:kh + (H - 1) * S + 1:S,
                            kw:kw + (W - 1) * S + 1:S, :].add(contrib[:, :, :, kh, kw, :])
    return y


def sparse_conv_transpose_forward(x_nchw, weight_kv_ci_co):
    """PyTorch-convention (NCHW) wrapper around the channels-last core."""
    x_nhwc = jnp.transpose(x_nchw, (0, 2, 3, 1))
    y_nhwc = sparse_conv_transpose_forward_nhwc(
        x_nhwc, weight_kv_ci_co, KERNEL_SIZE, STRIDE)
    return jnp.transpose(y_nhwc, (0, 3, 1, 2))


if __name__ == "__main__":
    key = jax.random.PRNGKey(0)
    kx, kw = jax.random.split(key)

    # Small deterministic inputs: batch=2, Cin=4, 16x16 spatial grid.
    N, H, W = 2, 16, 16
    x = jax.random.normal(kx, (N, IN_CHANNELS, H, W), dtype=jnp.float32)

    # Deterministic weight init, ME layout (kernel_volume, in_channels, out_channels).
    fan = IN_CHANNELS * KERNEL_SIZE * KERNEL_SIZE
    weight = jax.random.uniform(
        kw, (KERNEL_SIZE * KERNEL_SIZE, IN_CHANNELS, OUT_CHANNELS),
        minval=-1.0 / (fan ** 0.5), maxval=1.0 / (fan ** 0.5), dtype=jnp.float32)

    out = sparse_conv_transpose_forward(x, weight)
    out = jax.block_until_ready(out)

    # Reference: plain-JAX einsum of the same formula + explicit scatter-add.
    ref_contrib = jnp.einsum(
        "nhwc,ckd->nhwkd",
        jnp.transpose(x, (0, 2, 3, 1)),
        jnp.transpose(weight, (1, 0, 2)).reshape(
            IN_CHANNELS, KERNEL_SIZE * KERNEL_SIZE, OUT_CHANNELS))
    ref_contrib = ref_contrib.reshape(
        N, H, W, KERNEL_SIZE, KERNEL_SIZE, OUT_CHANNELS)
    Ho = (H - 1) * STRIDE + KERNEL_SIZE
    Wo = (W - 1) * STRIDE + KERNEL_SIZE
    ref = jnp.zeros((N, Ho, Wo, OUT_CHANNELS), jnp.float32)
    for kh in range(KERNEL_SIZE):
        for kw_ in range(KERNEL_SIZE):
            ref = ref.at[:, kh:kh + (H - 1) * STRIDE + 1:STRIDE,
                            kw_:kw_ + (W - 1) * STRIDE + 1:STRIDE, :].add(
                ref_contrib[:, :, :, kh, kw_, :])
    ref = jnp.transpose(ref, (0, 3, 1, 2))

    assert out.shape == (N, OUT_CHANNELS, Ho, Wo), out.shape
    assert jnp.allclose(out, ref, atol=1e-5, rtol=1e-5)
    print("KERNEL_OK")
</pallas_src>

<mosaic_0001>
module attributes {stable_mosaic.version = 11 : i64} {
  func.func @_feature_matmul_kernel(%arg0: i32, %arg1: memref<256x4xf32, #tpu.memory_space<vmem>>, %arg2: memref<4x128xf32, #tpu.memory_space<vmem>>, %arg3: memref<256x128xf32, #tpu.memory_space<vmem>>) attributes {dimension_semantics = [#tpu.dimension_semantics<parallel>], iteration_bounds = array<i64: 2>, scalar_prefetch = 0 : i64, scratch_operands = 0 : i64, tpu.core_type = #tpu.core_type<tc>, window_params = [{transform_indices = @transform_0, window_bounds = array<i64: 256, 4>}, {pipeline_mode = #tpu.pipeline_mode<synchronous>, transform_indices = @transform_1, window_bounds = array<i64: 4, 128>}, {transform_indices = @transform_2, window_bounds = array<i64: 256, 128>}]} {
    %c0 = arith.constant 0 : index
    %c0_0 = arith.constant 0 : index
    %0 = vector.load %arg1[%c0, %c0_0] : memref<256x4xf32, #tpu.memory_space<vmem>>, vector<256x4xf32>
    %c0_1 = arith.constant 0 : index
    %c0_2 = arith.constant 0 : index
    %1 = vector.load %arg2[%c0_1, %c0_2] : memref<4x128xf32, #tpu.memory_space<vmem>>, vector<4x128xf32>
    %cst = arith.constant dense<0.000000e+00> : vector<256x128xf32>
    %2 = tpu.matmul %0, %1, %cst {dimension_numbers = #tpu.dot_dimension_numbers<[1], [0], [0], [1], [0, 0, 1, 1], [], []>} : vector<256x4xf32>, vector<4x128xf32>, vector<256x128xf32> -> vector<256x128xf32>
    %c0_3 = arith.constant 0 : index
    %c0_4 = arith.constant 0 : index
    %3 = vector.load %arg3[%c0_3, %c0_4] : memref<256x128xf32, #tpu.memory_space<vmem>>, vector<256x128xf32>
    tpu.vector_store %arg3[%c0_3, %c0_4], %2 {strides = array<i32>} : memref<256x128xf32, #tpu.memory_space<vmem>>, vector<256x128xf32>,
    return
  }
  func.func @transform_0(%arg0: i32) -> (i32, i32) {
    %c0_i32 = arith.constant 0 : i32
    %c0_i32_0 = arith.constant 0 : i32
    return %arg0, %c0_i32 : i32, i32
  }
  func.func @transform_1(%arg0: i32) -> (i32, i32) {
    %c0_i32 = arith.constant 0 : i32
    %c0_i32_0 = arith.constant 0 : i32
    %c0_i32_1 = arith.constant 0 : i32
    return %c0_i32, %c0_i32_0 : i32, i32
  }
  func.func @transform_2(%arg0: i32) -> (i32, i32) {
    %c0_i32 = arith.constant 0 : i32
    %c0_i32_0 = arith.constant 0 : i32
    return %arg0, %c0_i32 : i32, i32
  }
}

</mosaic_0001>

<llo_original>
// kernel: tpu_custom_call.1
$region0: #{tpu_custom_call.1}
  #allocation0 [shape = 'u32[]', space=smem, size = 0x4, offset = 0x4, fixed_abs, tag = 'smem constant byte address 0x4 - core index']
  #allocation1 [shape = 'u32[72,128]{1,0:T(1,128)}', space=vmem, size = 0x9000, scoped, tag = 'internal scratch']
  %s0 = inlined_call_operand.vmem [shape: f32[512,4], index: 0, kind: input, shape index: {}]
  %s1 = inlined_call_operand.vmem [shape: f32[4,128], index: 1, kind: input, shape index: {}]
  %s2 = inlined_call_operand.hbm [shape: f32[512,128], index: 2, kind: output, shape index: {}]
  %s3 = sld [smem:[#allocation0]]
  $region41: #{tpu_custom_call.1} parent=0
    _
  %s5 = ssub.s32 1, %s3
  %s6 = scalar_select 0, %s5, %s3
  $region1: #{tpu_custom_call.1} parent=0
    #allocation2 [shape = 'u8[262144]{0}', space=vmem, size = 0x40000, scoped, tag = 'output window, operand 0']
    #allocation3 [shape = 's32[2]{0}', space=sflag, size = 0x8, scoped, tag = 'scoped memory for tpu_custom_call.1']
    %7 = vsyncpa [#allocation3], 0
    %s8 = scalar_lea.sflag [#allocation3], 1
    %9 = vsyncpa %s8, 0
    loop: start=0, step=1, limit=4
    $region2: #{tpu_custom_call.1} parent=1 // loop_pre_header
      _
    $region3: #{tpu_custom_call.1} parent=1 // loop_header
      %s11 = sphi 0, %s15
      %p12 = scmp.ge.s32.totalorder %s11, 4
      %s21 = sphi 0, %s23
      %s24 = sphi 0, %s21
      %s25 = sphi 0, %s24
      %s41 = sphi 0, %s25
      %s45 = sphi 0, %s45
      %s47 = sphi 0, %s45
      %s48 = sphi 0, %s47
      %s62 = sphi 0, %s48
      %s68 = sphi 0, %s70
      %s71 = sphi 0, %s68
      %s72 = sphi 0, %s71
      %s88 = sphi 0, %s72
    $region4: #{tpu_custom_call.1} parent=1 // loop_header_branch
      %14 = sbr.rel (%p12) target = $region8
    $region5: #{tpu_custom_call.1} parent=1 // loop_body
      %s16 = ssub.s32 %s11, 1
      %s17 = ssub.s32 %s11, 2
      %s18 = sadd.s32 %s11, 1
      %s19 = ssub.s32 %s11, %s18
      %p20 = scmp.eq.s32.totalorder %s19, 0
      %s22 = sadd.s32 %s21, 1
      %s23 = scalar_select %p20, %s21, %s22
      %p26 = pneg %p20
      %p27 = scmp.eq.s32.totalorder %s11, 1
      %p28 = por %p26, %p27
      %p29 = scmp.ne.s32.totalorder %s21, %s24
      %p30 = scmp.eq.s32.totalorder %s11, 0
      %p31 = por %p29, %p30
      %p32 = scmp.ne.s32.totalorder %s21, %s24
      %p33 = scmp.eq.s32.totalorder %s16, 1
      %p34 = por %p32, %p33
      %p35 = scmp.ne.s32.totalorder %s24, %s25
      %p36 = scmp.eq.s32.totalorder %s16, 0
      %p37 = por %p35, %p36
      %p38 = scmp.ne.s32.totalorder %s24, %s25
      %p39 = scmp.eq.s32.totalorder %s17, 1
      %p40 = por %p38, %p39
      %p42 = scmp.ne.s32.totalorder %s25, %s41
      %p43 = scmp.eq.s32.totalorder %s17, 0
      %p44 = por %p42, %p43
      %s46 = sadd.s32 %s45, 1
      %p49 = scmp.eq.s32.totalorder %s11, 1
      %p50 = scmp.ne.s32.totalorder %s45, %s47
      %p51 = scmp.eq.s32.totalorder %s11, 0
      %p52 = por %p50, %p51
      %p53 = scmp.ne.s32.totalorder %s45, %s47
      %p54 = scmp.eq.s32.totalorder %s16, 1
      %p55 = por %p53, %p54
      %p56 = scmp.ne.s32.totalorder %s47, %s48
      %p57 = scmp.eq.s32.totalorder %s16, 0
      %p58 = por %p56, %p57
      %p59 = scmp.ne.s32.totalorder %s47, %s48
      %p60 = scmp.eq.s32.totalorder %s17, 1
      %p61 = por %p59, %p60
      %p63 = scmp.ne.s32.totalorder %s48, %s62
      %p64 = scmp.eq.s32.totalorder %s17, 0
      %p65 = por %p63, %p64
      %s66 = ssub.s32 %s11, %s18
      %p67 = scmp.eq.s32.totalorder %s66, 0
      %s69 = sadd.s32 %s68, 1
      %s70 = scalar_select %p67, %s68, %s69
      %p73 = pneg %p67
      %p74 = scmp.eq.s32.totalorder %s11, 1
      %p75 = por %p73, %p74
      %p76 = scmp.ne.s32.totalorder %s68, %s71
      %p77 = scmp.eq.s32.totalorder %s11, 0
      %p78 = por %p76, %p77
      %p79 = scmp.ne.s32.totalorder %s68, %s71
      %p80 = scmp.eq.s32.totalorder %s16, 1
      %p81 = por %p79, %p80
      %p82 = scmp.ne.s32.totalorder %s71, %s72
      %p83 = scmp.eq.s32.totalorder %s16, 0
      %p84 = por %p82, %p83
      %p85 = scmp.ne.s32.totalorder %s71, %s72
      %p86 = scmp.eq.s32.totalorder %s17, 1
      %p87 = por %p85, %p86
      %p89 = scmp.ne.s32.totalorder %s72, %s88
      %p90 = scmp.eq.s32.totalorder %s17, 0
      %p91 = por %p89, %p90
      %p92 = scmp.le.s32.totalorder 1, %s11
      %p93 = scmp.lt.s32.totalorder %s11, 3
      %p94 = pnand %p92, %p93
      %p95 = pneg %p94
      // Predicated region
      $region9: #{tpu_custom_call.1} parent=5 // pred_check
        _
      $region10: #{tpu_custom_call.1} parent=5 // pred_check_branch
        %97 = sbr.rel (%p94) target = $region12
      $region11: #{tpu_custom_call.1} parent=5 // pred_region
        %s98 = ssub.s32 %s11, 1
        // Predicated region
        $region13: #{tpu_custom_call.1} parent=11 // pred_check
          %p99 = pneg %p58
        $region14: #{tpu_custom_call.1} parent=11 // pred_check_branch
          %101 = sbr.rel (%p99) target = $region16
        $region15: #{tpu_custom_call.1} parent=11 // pred_region
          _
        $region16: #{tpu_custom_call.1} parent=11 // pred_fallthru
          _
      $region12: #{tpu_custom_call.1} parent=5 // pred_fallthru
        _
      %p102 = scmp.lt.s32.totalorder %s11, 2
      // Predicated region
      $region17: #{tpu_custom_call.1} parent=5 // pred_check
        %p103 = pneg %p102
      $region18: #{tpu_custom_call.1} parent=5 // pred_check_branch
        %105 = sbr.rel (%p103) target = $region20
      $region19: #{tpu_custom_call.1} parent=5 // pred_region
        // Predicated region
        $region21: #{tpu_custom_call.1} parent=19 // pred_check
          %p106 = pneg %p31
        $region22: #{tpu_custom_call.1} parent=19 // pred_check_branch
          %108 = sbr.rel (%p106) target = $region24
        $region23: #{tpu_custom_call.1} parent=19 // pred_region
          %s109 = smul.u32 32, %s11
          %p110 = scmp.lt.s32.totalorder %s109, 63
          %s111 = scalar_select %p110, %s109, 63
          %s112 = smul.addr %s111, 8
          %s113 = scalar_lea.vmem %s0, %s112
          %s114 = smul.u32 32, %s11
        $region24: #{tpu_custom_call.1} parent=19 // pred_fallthru
          _
      $region20: #{tpu_custom_call.1} parent=5 // pred_fallthru
        _
      %p115 = scmp.le.s32.totalorder 1, %s11
      %p116 = scmp.lt.s32.totalorder %s11, 3
      %p117 = pnand %p115, %p116
      %p118 = pneg %p117
      // Predicated region
      $region25: #{tpu_custom_call.1} parent=5 // pred_check
        _
      $region26: #{tpu_custom_call.1} parent=5 // pred_check_branch
        %120 = sbr.rel (%p117) target = $region28
      $region27: #{tpu_custom_call.1} parent=5 // pred_region
        %s121 = ssub.s32 %s11, 1
        %s122 = smul.u32 32, %s16
        %p123 = scmp.lt.s32.totalorder %s122, 63
        %s124 = scalar_select %p123, %s122, 63
        %s125 = smul.addr %s124, 8
        %s126 = scalar_lea.vmem %s0, %s125
        %p127 = pneg %p37
        %p128 = pneg %p34
        %p129 = pneg %p58
        %p130 = pneg %p55
        %p131 = pneg %p84
        %p132 = pneg %p81
        %s133 = sand.u32 %s71, 1
        %s134 = scalar_lea.sflag [#allocation3], %s133
        %s135 = sand.u32 %s71, 1
        %s136 = smul.addr %s135, 256
        %s137 = scalar_lea.vmem [#allocation2], %s136
        %s138 = smul.u32 32, %s16
        %p139 = scmp.lt.s32.totalorder %s138, 63
        %s140 = scalar_select %p139, %s138, 63
        %s141 = smul.addr %s140, 8
        %s142 = scalar_lea.vmem %s0, %s141
        %s143 = smul.u32 32, %s16
        %s144 = smul.u32 32, %s16
        %v145 = vld [vmem:[%s142] sm:$0xff]
        %v146 = vld [vmem:[%s142 + $0x8] sm:$0xff]
        %v147 = vld [vmem:[%s142 + $0x10] sm:$0xff]
        %v148 = vld [vmem:[%s142 + $0x18] sm:$0xff]
        %v149 = vld [vmem:[%s142 + $0x20] sm:$0xff]
        %v150 = vld [vmem:[%s142 + $0x28] sm:$0xff]
        %v151 = vld [vmem:[%s142 + $0x30] sm:$0xff]
        %v152 = vld [vmem:[%s142 + $0x38] sm:$0xff]
        %v153 = vld [vmem:[%s142 + $0x40] sm:$0xff]
        %v154 = vld [vmem:[%s142 + $0x48] sm:$0xff]
        %v155 = vld [vmem:[%s142 + $0x50] sm:$0xff]
        %v156 = vld [vmem:[%s142 + $0x58] sm:$0xff]
        %v157 = vld [vmem:[%s142 + $0x60] sm:$0xff]
        %v158 = vld [vmem:[%s142 + $0x68] sm:$0xff]
        %v159 = vld [vmem:[%s142 + $0x70] sm:$0xff]
        %v160 = vld [vmem:[%s142 + $0x78] sm:$0xff]
        %v161 = vld [vmem:[%s142 + $0x80] sm:$0xff]
        %v162 = vld [vmem:[%s142 + $0x88] sm:$0xff]
        %v163 = vld [vmem:[%s142 + $0x90] sm:$0xff]
        %v164 = vld [vmem:[%s142 + $0x98] sm:$0xff]
        %v165 = vld [vmem:[%s142 + $0xa0] sm:$0xff]
        %v166 = vld [vmem:[%s142 + $0xa8] sm:$0xff]
        %v167 = vld [vmem:[%s142 + $0xb0] sm:$0xff]
        %v168 = vld [vmem:[%s142 + $0xb8] sm:$0xff]
        %v169 = vld [vmem:[%s142 + $0xc0] sm:$0xff]
        %v170 = vld [vmem:[%s142 + $0xc8] sm:$0xff]
        %v171 = vld [vmem:[%s142 + $0xd0] sm:$0xff]
        %v172 = vld [vmem:[%s142 + $0xd8] sm:$0xff]
        %v173 = vld [vmem:[%s142 + $0xe0] sm:$0xff]
        %v174 = vld [vmem:[%s142 + $0xe8] sm:$0xff]
        %v175 = vld [vmem:[%s142 + $0xf0] sm:$0xff]
        %v176 = vld [vmem:[%s142 + $0xf8] sm:$0xff]
        %v177 = vld [vmem:[%s1] sm:$0xf]
        %vm178 = vcmask 31744
        %v180 = vsel %vm178, %v145, 0
        %v183 = vsel %vm178, %v146, 0
        %v186 = vsel %vm178, %v147, 0
        %v189 = vsel %vm178, %v148, 0
        %v192 = vsel %vm178, %v149, 0
        %v195 = vsel %vm178, %v150, 0
        %v198 = vsel %vm178, %v151, 0
        %v201 = vsel %vm178, %v152, 0
        %v204 = vsel %vm178, %v153, 0
        %v207 = vsel %vm178, %v154, 0
        %v210 = vsel %vm178, %v155, 0
        %v213 = vsel %vm178, %v156, 0
        %v216 = vsel %vm178, %v157, 0
        %v219 = vsel %vm178, %v158, 0
        %v222 = vsel %vm178, %v159, 0
        %v225 = vsel %vm178, %v160, 0
        %v228 = vsel %vm178, %v161, 0
        %v231 = vsel %vm178, %v162, 0
        %v234 = vsel %vm178, %v163, 0
        %v237 = vsel %vm178, %v164, 0
        %v240 = vsel %vm178, %v165, 0
        %v243 = vsel %vm178, %v166, 0
        %v246 = vsel %vm178, %v167, 0
        %v249 = vsel %vm178, %v168, 0
        %v252 = vsel %vm178, %v169, 0
        %v255 = vsel %vm178, %v170, 0
        %v258 = vsel %vm178, %v171, 0
        %v261 = vsel %vm178, %v172, 0
        %v264 = vsel %vm178, %v173, 0
        %v267 = vsel %vm178, %v174, 0
        %v270 = vsel %vm178, %v175, 0
        %v273 = vsel %vm178, %v176, 0
        %vm275 = vcmask 1043456
        %v277 = vsel %vm275, %v177, 0
        %279 = vmatpush.msra.mxu0 0.0
        %280 = vmatpush.msra.mxu0 0.0
        %281 = vmatpush.msra.mxu0 0.0
        %282 = vmatpush.msra.mxu0 0.0
        %283 = vmatpush.msra.mxu0 0.0
        %284 = vmatpush.msra.mxu0 0.0
        %285 = vmatpush.msra.mxu0 0.0
        %286 = vmatpush.msra.mxu0 0.0
        %287 = vmatpush.msra.mxu0 0.0
        %288 = vmatpush.msra.mxu0 0.0
        %289 = vmatpush.msra.mxu0 0.0
        %290 = vmatpush.msra.mxu0 0.0
        %291 = vmatpush.msra.mxu0 0.0
        %292 = vmatpush.msra.mxu0 0.0
        %293 = vmatpush.msra.mxu0 0.0
        %294 = vmatpush.msra.mxu0 %v277
        %295 = vmatmul.f32.gmra.mxu0 %v180
        %v296 = vpop.f32.mrf.mxu0
        %v297 = vadd.f32 0.0, %v296
        %298 = vmatmul.f32.gmra.mxu0 %v183
        %v299 = vpop.f32.mrf.mxu0
        %v300 = vadd.f32 0.0, %v299
        %301 = vmatmul.f32.gmra.mxu0 %v186
        %v302 = vpop.f32.mrf.mxu0
        %v303 = vadd.f32 0.0, %v302
        %304 = vmatmul.f32.gmra.mxu0 %v189
        %v305 = vpop.f32.mrf.mxu0
        %v306 = vadd.f32 0.0, %v305
        %307 = vmatmul.f32.gmra.mxu0 %v192
        %v308 = vpop.f32.mrf.mxu0
        %v309 = vadd.f32 0.0, %v308
        %310 = vmatmul.f32.gmra.mxu0 %v195
        %v311 = vpop.f32.mrf.mxu0
        %v312 = vadd.f32 0.0, %v311
        %313 = vmatmul.f32.gmra.mxu0 %v198
        %v314 = vpop.f32.mrf.mxu0
        %v315 = vadd.f32 0.0, %v314
        %316 = vmatmul.f32.gmra.mxu0 %v201
        %v317 = vpop.f32.mrf.mxu0
        %v318 = vadd.f32 0.0, %v317
        %319 = vmatmul.f32.gmra.mxu0 %v204
        %v320 = vpop.f32.mrf.mxu0
        %v321 = vadd.f32 0.0, %v320
        %322 = vmatmul.f32.gmra.mxu0 %v207
        %v323 = vpop.f32.mrf.mxu0
        %v324 = vadd.f32 0.0, %v323
        %325 = vmatmul.f32.gmra.mxu0 %v210
        %v326 = vpop.f32.mrf.mxu0
        %v327 = vadd.f32 0.0, %v326
        %328 = vmatmul.f32.gmra.mxu0 %v213
        %v329 = vpop.f32.mrf.mxu0
        %v330 = vadd.f32 0.0, %v329
        %331 = vmatmul.f32.gmra.mxu0 %v216
        %v332 = vpop.f32.mrf.mxu0
        %v333 = vadd.f32 0.0, %v332
        %334 = vmatmul.f32.gmra.mxu0 %v219
        %v335 = vpop.f32.mrf.mxu0
        %v336 = vadd.f32 0.0, %v335
        %337 = vmatmul.f32.gmra.mxu0 %v222
        %v338 = vpop.f32.mrf.mxu0
        %v339 = vadd.f32 0.0, %v338
        %340 = vmatmul.f32.gmra.mxu0 %v225
        %v341 = vpop.f32.mrf.mxu0
        %v342 = vadd.f32 0.0, %v341
        %343 = vmatmul.f32.gmra.mxu0 %v228
        %v344 = vpop.f32.mrf.mxu0
        %v345 = vadd.f32 0.0, %v344
        %346 = vmatmul.f32.gmra.mxu0 %v231
        %v347 = vpop.f32.mrf.mxu0
        %v348 = vadd.f32 0.0, %v347
        %349 = vmatmul.f32.gmra.mxu0 %v234
        %v350 = vpop.f32.mrf.mxu0
        %v351 = vadd.f32 0.0, %v350
        %352 = vmatmul.f32.gmra.mxu0 %v237
        %v353 = vpop.f32.mrf.mxu0
        %v354 = vadd.f32 0.0, %v353
        %355 = vmatmul.f32.gmra.mxu0 %v240
        %v356 = vpop.f32.mrf.mxu0
        %v357 = vadd.f32 0.0, %v356
        %358 = vmatmul.f32.gmra.mxu0 %v243
        %v359 = vpop.f32.mrf.mxu0
        %v360 = vadd.f32 0.0, %v359
        %361 = vmatmul.f32.gmra.mxu0 %v246
        %v362 = vpop.f32.mrf.mxu0
        %v363 = vadd.f32 0.0, %v362
        %364 = vmatmul.f32.gmra.mxu0 %v249
        %v365 = vpop.f32.mrf.mxu0
        %v366 = vadd.f32 0.0, %v365
        %367 = vmatmul.f32.gmra.mxu0 %v252
        %v368 = vpop.f32.mrf.mxu0
        %v369 = vadd.f32 0.0, %v368
        %370 = vmatmul.f32.gmra.mxu0 %v255
        %v371 = vpop.f32.mrf.mxu0
        %v372 = vadd.f32 0.0, %v371
        %373 = vmatmul.f32.gmra.mxu0 %v258
        %v374 = vpop.f32.mrf.mxu0
        %v375 = vadd.f32 0.0, %v374
        %376 = vmatmul.f32.gmra.mxu0 %v261
        %v377 = vpop.f32.mrf.mxu0
        %v378 = vadd.f32 0.0, %v377
        %379 = vmatmul.f32.gmra.mxu0 %v264
        %v380 = vpop.f32.mrf.mxu0
        %v381 = vadd.f32 0.0, %v380
        %382 = vmatmul.f32.gmra.mxu0 %v267
        %v383 = vpop.f32.mrf.mxu0
        %v384 = vadd.f32 0.0, %v383
        %385 = vmatmul.f32.gmra.mxu0 %v270
        %v386 = vpop.f32.mrf.mxu0
        %v387 = vadd.f32 0.0, %v386
        %388 = vmatmul.f32.gmra.mxu0 %v273
        %v389 = vpop.f32.mrf.mxu0
        %v390 = vadd.f32 0.0, %v389
        %391 = vdwg.mxu0
        %392 = vst [vmem:[%s137] sm:$0xff] %v297
        %393 = vst [vmem:[%s137 + $0x8] sm:$0xff] %v300
        %394 = vst [vmem:[%s137 + $0x10] sm:$0xff] %v303
        %395 = vst [vmem:[%s137 + $0x18] sm:$0xff] %v306
        %396 = vst [vmem:[%s137 + $0x20] sm:$0xff] %v309
        %397 = vst [vmem:[%s137 + $0x28] sm:$0xff] %v312
        %398 = vst [vmem:[%s137 + $0x30] sm:$0xff] %v315
        %399 = vst [vmem:[%s137 + $0x38] sm:$0xff] %v318
        %400 = vst [vmem:[%s137 + $0x40] sm:$0xff] %v321
        %401 = vst [vmem:[%s137 + $0x48] sm:$0xff] %v324
        %402 = vst [vmem:[%s137 + $0x50] sm:$0xff] %v327
        %403 = vst [vmem:[%s137 + $0x58] sm:$0xff] %v330
        %404 = vst [vmem:[%s137 + $0x60] sm:$0xff] %v333
        %405 = vst [vmem:[%s137 + $0x68] sm:$0xff] %v336
        %406 = vst [vmem:[%s137 + $0x70] sm:$0xff] %v339
        %407 = vst [vmem:[%s137 + $0x78] sm:$0xff] %v342
        %408 = vst [vmem:[%s137 + $0x80] sm:$0xff] %v345
        %409 = vst [vmem:[%s137 + $0x88] sm:$0xff] %v348
        %410 = vst [vmem:[%s137 + $0x90] sm:$0xff] %v351
        %411 = vst [vmem:[%s137 + $0x98] sm:$0xff] %v354
        %412 = vst [vmem:[%s137 + $0xa0] sm:$0xff] %v357
        %413 = vst [vmem:[%s137 + $0xa8] sm:$0xff] %v360
        %414 = vst [vmem:[%s137 + $0xb0] sm:$0xff] %v363
        %415 = vst [vmem:[%s137 + $0xb8] sm:$0xff] %v366
        %416 = vst [vmem:[%s137 + $0xc0] sm:$0xff] %v369
        %417 = vst [vmem:[%s137 + $0xc8] sm:$0xff] %v372
        %418 = vst [vmem:[%s137 + $0xd0] sm:$0xff] %v375
        %419 = vst [vmem:[%s137 + $0xd8] sm:$0xff] %v378
        %420 = vst [vmem:[%s137 + $0xe0] sm:$0xff] %v381
        %421 = vst [vmem:[%s137 + $0xe8] sm:$0xff] %v384
        %422 = vst [vmem:[%s137 + $0xf0] sm:$0xff] %v387
        %423 = vst [vmem:[%s137 + $0xf8] sm:$0xff] %v390
        %s424 = sand.u32 %s71, 1
        %s425 = scalar_lea.sflag [#allocation3], %s424
        %s426 = sand.u32 %s71, 1
        %s427 = smul.addr %s426, 256
        %s428 = scalar_lea.vmem [#allocation2], %s427
        // Predicated region
        $region29: #{tpu_custom_call.1} parent=27 // pred_check
          %p429 = pneg %p81
        $region30: #{tpu_custom_call.1} parent=27 // pred_check_branch
          %431 = sbr.rel (%p429) target = $region32
        $region31: #{tpu_custom_call.1} parent=27 // pred_region
          %s432 = smul.u32 32, %s16
          %434 = vsyncadd %s425, 0
          %s435 = smul.addr %s432, 8
          %s436 = scalar_lea.hbm %s2, %s435
          %s437 = sshll.u32 %s428, 4
          %s438 = int_to_ptr.vmem [resolvable:$true] %s437
          %s439 = sshll.u32 %s436, 4
          %s440 = int_to_ptr.hbm [resolvable:$true] %s439
          %445 = dma.vmem_to_hbm [thread:$0]  %s438, 4096, %s440, %s425, 128, 128, 8
        $region32: #{tpu_custom_call.1} parent=27 // pred_fallthru
          _
      $region28: #{tpu_custom_call.1} parent=5 // pred_fallthru
        _
      %p446 = scmp.le.s32.totalorder 2, %s11
      // Predicated region
      $region33: #{tpu_custom_call.1} parent=5 // pred_check
        %p447 = pneg %p446
      $region34: #{tpu_custom_call.1} parent=5 // pred_check_branch
        %449 = sbr.rel (%p447) target = $region36
      $region35: #{tpu_custom_call.1} parent=5 // pred_region
        %s450 = ssub.s32 %s11, 2
        // Predicated region
        $region37: #{tpu_custom_call.1} parent=35 // pred_check
          %p451 = pneg %p87
        $region38: #{tpu_custom_call.1} parent=35 // pred_check_branch
          %453 = sbr.rel (%p451) target = $region40
        $region39: #{tpu_custom_call.1} parent=35 // pred_region
          %s454 = sand.u32 %s72, 1
          %s455 = scalar_lea.sflag [#allocation3], %s454
          %s456 = sand.u32 %s72, 1
          %s457 = smul.addr %s456, 256
          %s458 = scalar_lea.vmem [#allocation2], %s457
          %460 = dma.done %s455, 4096
        $region40: #{tpu_custom_call.1} parent=35 // pred_fallthru
          _
      $region36: #{tpu_custom_call.1} parent=5 // pred_fallthru
        _
    $region6: #{tpu_custom_call.1} parent=1 // loop_footer
      %s15 = sadd.s32 1, %s11
    $region7: #{tpu_custom_call.1} parent=1 // loop_footer_branch
      %10 = sbr.rel target = $region3
    $region8: #{tpu_custom_call.1} parent=1 // loop_exit
      _
    %461 = vsyncpa [#allocation3], 1
    %s462 = scalar_lea.sflag [#allocation3], 1
    %463 = vsyncpa %s462, 1

</llo_original>
